<compile_context>
chip_gen: v7x
topology: tpu7x:2x2x1
jax: 0.10.0
libtpu: 0.0.40
codegen_flags: <defaults>
</compile_context>

<pallas_src>
import functools

import jax
import jax.numpy as jnp
from jax.experimental import pallas as pl
from jax.experimental.pallas import tpu as pltpu

_EPS = 1e-8
_LANE = 128
_SUBL = 8
_MAX_TILE_ROWS = 2048   # (2048,128) f32 = 1 MiB per input block
_NUM_SLICES = 2         # leading "parallel" grid axis (v7x has 2 TensorCores)


def _accumulate(acc_ref, idx, x):
    """acc_ref[idx*8:(idx+1)*8, :] += partial sum of x (shape (tile_rows, 128))."""
    tile_rows = x.shape[0]
    lo = idx * _SUBL
    if tile_rows % _SUBL == 0:
        # Layout-preserving reshape; reduction over the leading (untiled) axis
        # lowers to plain vreg adds on the VPU (no XLU work in the hot loop).
        acc_ref[lo:lo + _SUBL, :] += x.reshape(-1, _SUBL, _LANE).sum(axis=0)
    else:
        # Tiny-tensor corner case (rows < 8 / not sublane aligned).
        acc_ref[lo:lo + 1, :] += jnp.sum(x, axis=0, keepdims=True)


def _sums_kernel(o_ref, m_ref, acc_ref, *, tile_rows, tiles_per_slice,
                 rows_valid, needs_mask):
    """Accumulate [sum(o*m), sum(o*o), sum(m*m)] vector partials for one slice."""
    c = pl.program_id(0)   # parallel slice (maps to a TensorCore on v7x)
    t = pl.program_id(1)   # sequential tile within the slice

    @pl.when(t == 0)
    def _init():
        acc_ref[...] = jnp.zeros_like(acc_ref)

    o = o_ref[...].astype(jnp.float32)
    m = m_ref[...].astype(jnp.float32)

    if needs_mask:
        # Mask rows past the logical end of the tensor (ragged tail / padded or
        # duplicated grid steps).  where() is a select, so any garbage (even
        # NaN) in the out-of-bounds part of the block is discarded.
        row0 = (c * tiles_per_slice + t) * tile_rows
        local = jax.lax.broadcasted_iota(jnp.int32, (tile_rows, _LANE), 0)
        valid = (row0 + local) < rows_valid
        o = jnp.where(valid, o, jnp.float32(0.0))
        m = jnp.where(valid, m, jnp.float32(0.0))

    _accumulate(acc_ref, 0, o * m)
    _accumulate(acc_ref, 1, o * o)
    _accumulate(acc_ref, 2, m * m)


def _dice_partial_sums(output, mask):
    """Returns a (3,) f32 array: [sum(o*m), sum(o*o), sum(m*m)] over all elems."""
    o_flat = output.reshape(-1)
    m_flat = mask.reshape(-1)
    n = o_flat.shape[0]

    rem = (-n) % _LANE
    if rem:
        # TODO(synk): rare path (element count not a multiple of 128); this pad
        # copies the flat tensor once.  Could be removed with 1-D blocks plus
        # lane-level masking if such shapes ever matter.
        o_flat = jnp.pad(o_flat, (0, rem))
        m_flat = jnp.pad(m_flat, (0, rem))
    rows = (n + rem) // _LANE

    tile_rows = rows if rows <= _MAX_TILE_ROWS else _MAX_TILE_ROWS
    total_tiles = pl.cdiv(rows, tile_rows)
    tiles_per_slice = pl.cdiv(total_tiles, _NUM_SLICES)
    grid = (_NUM_SLICES, tiles_per_slice)
    needs_mask = (_NUM_SLICES * tiles_per_slice * tile_rows) != rows

    o2 = o_flat.reshape(rows, _LANE)   # free reshape of a contiguous buffer
    m2 = m_flat.reshape(rows, _LANE)

    def in_index(c, t):
        # Clamp so grid-padding / duplicated steps map to an in-bounds block;
        # their contribution is masked to zero inside the kernel.
        return (jnp.minimum(c * tiles_per_slice + t, total_tiles - 1), 0)

    kernel = functools.partial(
        _sums_kernel, tile_rows=tile_rows, tiles_per_slice=tiles_per_slice,
        rows_valid=rows, needs_mask=needs_mask)

    partials = pl.pallas_call(
        kernel,
        out_shape=jax.ShapeDtypeStruct((_NUM_SLICES, 3 * _SUBL, _LANE),
                                       jnp.float32),
        grid_spec=pltpu.PrefetchScalarGridSpec(
            num_scalar_prefetch=0,
            grid=grid,
            in_specs=[pl.BlockSpec((tile_rows, _LANE), in_index),
                      pl.BlockSpec((tile_rows, _LANE), in_index)],
            out_specs=pl.BlockSpec((None, 3 * _SUBL, _LANE),
                                   lambda c, t: (c, 0, 0)),
        ),
        compiler_params=pltpu.CompilerParams(
            dimension_semantics=("parallel", "arbitrary")),
        cost_estimate=pl.CostEstimate(
            flops=6 * n,
            transcendentals=0,
            bytes_accessed=2 * 4 * n + _NUM_SLICES * 3 * _SUBL * _LANE * 4),
    )(o2, m2)

    # Combine the per-slice vector partials (6144 floats) -> 3 scalars.
    return partials.reshape(_NUM_SLICES, 3, _SUBL, _LANE).sum(axis=(0, 2, 3))


def dice_loss_lv_2d_3d(output_2D, output_3D, mask_2D, mask_3D, a=1.0, b=1.0):
    """Pallas implementation of DICELoss_LV_2D_3D.forward -> (loss1, loss2, loss)."""
    s2d = _dice_partial_sums(output_2D, mask_2D)
    s3d = _dice_partial_sums(output_3D, mask_3D)
    eps = jnp.float32(_EPS)
    dice1 = 2.0 * (s2d[0] + eps) / (s2d[1] + s2d[2] + eps)
    loss1 = 1.0 - dice1
    dice2 = 2.0 * (s3d[0] + eps) / (s3d[1] + s3d[2] + eps)
    loss2 = 1.0 - dice2
    loss = a * loss1 + b * loss2
    return loss1, loss2, loss


def _reference(output_2D, output_3D, mask_2D, mask_3D, a=1.0, b=1.0):
    eps = 1e-8

    def one(o, m):
        o = o.astype(jnp.float32)
        m = m.astype(jnp.float32)
        inter = jnp.sum(o * m)
        d1 = jnp.sum(o * o)
        d2 = jnp.sum(m * m)
        return 1.0 - 2.0 * (inter + eps) / (d1 + d2 + eps)

    l1 = one(output_2D, mask_2D)
    l2 = one(output_3D, mask_3D)
    return l1, l2, a * l1 + b * l2


if __name__ == "__main__":
    key = jax.random.PRNGKey(0)
    k1, k2, k3, k4 = jax.random.split(key, 4)

    B, C, H, W = 2, 4, 16, 16
    D = 8
    output_2D = jax.random.uniform(k1, (B, C, H, W), dtype=jnp.float32)
    mask_2D = jax.random.bernoulli(k2, p=0.3, shape=(B, C, H, W)).astype(jnp.float32)
    output_3D = jax.random.uniform(k3, (B, C, D, H, W), dtype=jnp.float32)
    mask_3D = jax.random.bernoulli(k4, p=0.3, shape=(B, C, D, H, W)).astype(jnp.float32)

    loss_fn = jax.jit(functools.partial(dice_loss_lv_2d_3d, a=1.0, b=1.0))
    loss1, loss2, loss = jax.block_until_ready(
        loss_fn(output_2D, output_3D, mask_2D, mask_3D))

    r1, r2, r = _reference(output_2D, output_3D, mask_2D, mask_3D, a=1.0, b=1.0)
    assert abs(float(loss1) - float(r1)) < 1e-4, (loss1, r1)
    assert abs(float(loss2) - float(r2)) < 1e-4, (loss2, r2)
    assert abs(float(loss) - float(r)) < 1e-4, (loss, r)

    print("KERNEL_OK")
</pallas_src>

<mosaic_0001>
module attributes {stable_mosaic.version = 11 : i64} {
  func.func @_sums_kernel(%arg0: i32, %arg1: i32, %arg2: memref<128x128xf32, #tpu.memory_space<vmem>>, %arg3: memref<128x128xf32, #tpu.memory_space<vmem>>, %arg4: memref<1x24x128xf32, #tpu.memory_space<vmem>>) attributes {dimension_semantics = [#tpu.dimension_semantics<parallel>, #tpu.dimension_semantics<arbitrary>], iteration_bounds = array<i64: 2, 1>, scalar_prefetch = 0 : i64, scratch_operands = 0 : i64, tpu.core_type = #tpu.core_type<tc>, window_params = [{transform_indices = @transform_0, window_bounds = array<i64: 128, 128>}, {transform_indices = @transform_1, window_bounds = array<i64: 128, 128>}, {transform_indices = @transform_2, window_bounds = array<i64: 1, 24, 128>}]} {
    %c0_i32 = arith.constant 0 : i32
    %0 = arith.cmpi eq, %arg1, %c0_i32 : i32
    %1 = arith.extui %0 : i1 to i32
    %c0_i32_0 = arith.constant 0 : i32
    %2 = arith.cmpi ne, %1, %c0_i32_0 : i32
    scf.if %2 {
      %cst_25 = arith.constant 0.000000e+00 : f32
      %44 = vector.broadcast %cst_25 : f32 to vector<24x128xf32>
      %c0_26 = arith.constant 0 : index
      %c0_27 = arith.constant 0 : index
      %c0_28 = arith.constant 0 : index
      %45 = vector.load %arg4[%c0_26, %c0_27, %c0_28] : memref<1x24x128xf32, #tpu.memory_space<vmem>>, vector<1x24x128xf32>
      %46 = vector.shape_cast %45 : vector<1x24x128xf32> to vector<24x128xf32>
      %47 = vector.shape_cast %44 : vector<24x128xf32> to vector<1x24x128xf32>
      tpu.vector_store %arg4[%c0_26, %c0_27, %c0_28], %47 {strides = array<i32>} : memref<1x24x128xf32, #tpu.memory_space<vmem>>, vector<1x24x128xf32>,
    } else {
    }
    %c0 = arith.constant 0 : index
    %c0_1 = arith.constant 0 : index
    %3 = vector.load %arg2[%c0, %c0_1] : memref<128x128xf32, #tpu.memory_space<vmem>>, vector<128x128xf32>
    %c0_2 = arith.constant 0 : index
    %c0_3 = arith.constant 0 : index
    %4 = vector.load %arg3[%c0_2, %c0_3] : memref<128x128xf32, #tpu.memory_space<vmem>>, vector<128x128xf32>
    %c1_i32 = arith.constant 1 : i32
    %5 = arith.muli %arg0, %c1_i32 : i32
    %6 = arith.addi %5, %arg1 : i32
    %c128_i32 = arith.constant 128 : i32
    %7 = arith.muli %6, %c128_i32 : i32
    %8 = tpu.iota {dimensions = array<i32: 0>} : vector<128x128xi32>
    %9 = vector.broadcast %7 : i32 to vector<128x128xi32>
    %10 = arith.addi %9, %8 : vector<128x128xi32>
    %c128_i32_4 = arith.constant 128 : i32
    %11 = vector.broadcast %c128_i32_4 : i32 to vector<128x128xi32>
    %12 = arith.cmpi slt, %10, %11 : vector<128x128xi32>
    %cst = arith.constant 0.000000e+00 : f32
    %13 = vector.broadcast %cst : f32 to vector<128x128xf32>
    %14 = arith.select %12, %3, %13 : vector<128x128xi1>, vector<128x128xf32>
    %cst_5 = arith.constant 0.000000e+00 : f32
    %15 = vector.broadcast %cst_5 : f32 to vector<128x128xf32>
    %16 = arith.select %12, %4, %15 : vector<128x128xi1>, vector<128x128xf32>
    %17 = arith.mulf %14, %16 : vector<128x128xf32>
    %c0_6 = arith.constant 0 : index
    %c0_7 = arith.constant 0 : index
    %c0_8 = arith.constant 0 : index
    %18 = vector.load %arg4[%c0_6, %c0_7, %c0_8] : memref<1x24x128xf32, #tpu.memory_space<vmem>>, vector<1x8x128xf32>
    %19 = vector.shape_cast %18 : vector<1x8x128xf32> to vector<8x128xf32>
    %20 = vector.shape_cast %17 : vector<128x128xf32> to vector<16x8x128xf32>
    %cst_9 = arith.constant dense<0.000000e+00> : vector<8x128xf32>
    %21 = vector.multi_reduction <add>, %20, %cst_9 [0] : vector<16x8x128xf32> to vector<8x128xf32>
    %22 = arith.addf %19, %21 : vector<8x128xf32>
    %c0_10 = arith.constant 0 : index
    %c0_11 = arith.constant 0 : index
    %c0_12 = arith.constant 0 : index
    %23 = vector.load %arg4[%c0_10, %c0_11, %c0_12] : memref<1x24x128xf32, #tpu.memory_space<vmem>>, vector<1x8x128xf32>
    %24 = vector.shape_cast %23 : vector<1x8x128xf32> to vector<8x128xf32>
    %25 = vector.shape_cast %22 : vector<8x128xf32> to vector<1x8x128xf32>
    tpu.vector_store %arg4[%c0_10, %c0_11, %c0_12], %25 {strides = array<i32>} : memref<1x24x128xf32, #tpu.memory_space<vmem>>, vector<1x8x128xf32>,
    %26 = arith.mulf %14, %14 : vector<128x128xf32>
    %c0_13 = arith.constant 0 : index
    %c8 = arith.constant 8 : index
    %c0_14 = arith.constant 0 : index
    %27 = vector.load %arg4[%c0_13, %c8, %c0_14] : memref<1x24x128xf32, #tpu.memory_space<vmem>>, vector<1x8x128xf32>
    %28 = vector.shape_cast %27 : vector<1x8x128xf32> to vector<8x128xf32>
    %29 = vector.shape_cast %26 : vector<128x128xf32> to vector<16x8x128xf32>
    %cst_15 = arith.constant dense<0.000000e+00> : vector<8x128xf32>
    %30 = vector.multi_reduction <add>, %29, %cst_15 [0] : vector<16x8x128xf32> to vector<8x128xf32>
    %31 = arith.addf %28, %30 : vector<8x128xf32>
    %c0_16 = arith.constant 0 : index
    %c8_17 = arith.constant 8 : index
    %c0_18 = arith.constant 0 : index
    %32 = vector.load %arg4[%c0_16, %c8_17, %c0_18] : memref<1x24x128xf32, #tpu.memory_space<vmem>>, vector<1x8x128xf32>
    %33 = vector.shape_cast %32 : vector<1x8x128xf32> to vector<8x128xf32>
    %34 = vector.shape_cast %31 : vector<8x128xf32> to vector<1x8x128xf32>
    tpu.vector_store %arg4[%c0_16, %c8_17, %c0_18], %34 {strides = array<i32>} : memref<1x24x128xf32, #tpu.memory_space<vmem>>, vector<1x8x128xf32>,
    %35 = arith.mulf %16, %16 : vector<128x128xf32>
    %c0_19 = arith.constant 0 : index
    %c16 = arith.constant 16 : index
    %c0_20 = arith.constant 0 : index
    %36 = vector.load %arg4[%c0_19, %c16, %c0_20] : memref<1x24x128xf32, #tpu.memory_space<vmem>>, vector<1x8x128xf32>
    %37 = vector.shape_cast %36 : vector<1x8x128xf32> to vector<8x128xf32>
    %38 = vector.shape_cast %35 : vector<128x128xf32> to vector<16x8x128xf32>
    %cst_21 = arith.constant dense<0.000000e+00> : vector<8x128xf32>
    %39 = vector.multi_reduction <add>, %38, %cst_21 [0] : vector<16x8x128xf32> to vector<8x128xf32>
    %40 = arith.addf %37, %39 : vector<8x128xf32>
    %c0_22 = arith.constant 0 : index
    %c16_23 = arith.constant 16 : index
    %c0_24 = arith.constant 0 : index
    %41 = vector.load %arg4[%c0_22, %c16_23, %c0_24] : memref<1x24x128xf32, #tpu.memory_space<vmem>>, vector<1x8x128xf32>
    %42 = vector.shape_cast %41 : vector<1x8x128xf32> to vector<8x128xf32>
    %43 = vector.shape_cast %40 : vector<8x128xf32> to vector<1x8x128xf32>
    tpu.vector_store %arg4[%c0_22, %c16_23, %c0_24], %43 {strides = array<i32>} : memref<1x24x128xf32, #tpu.memory_space<vmem>>, vector<1x8x128xf32>,
    return
  }
  func.func @transform_0(%arg0: i32, %arg1: i32) -> (i32, i32) {
    %c1_i32 = arith.constant 1 : i32
    %0 = arith.muli %arg0, %c1_i32 : i32
    %1 = arith.addi %0, %arg1 : i32
    %c0_i32 = arith.constant 0 : i32
    %2 = arith.minsi %1, %c0_i32 : i32
    %c0_i32_0 = arith.constant 0 : i32
    %c0_i32_1 = arith.constant 0 : i32
    return %2, %c0_i32_0 : i32, i32
  }
  func.func @transform_1(%arg0: i32, %arg1: i32) -> (i32, i32) {
    %c1_i32 = arith.constant 1 : i32
    %0 = arith.muli %arg0, %c1_i32 : i32
    %1 = arith.addi %0, %arg1 : i32
    %c0_i32 = arith.constant 0 : i32
    %2 = arith.minsi %1, %c0_i32 : i32
    %c0_i32_0 = arith.constant 0 : i32
    %c0_i32_1 = arith.constant 0 : i32
    return %2, %c0_i32_0 : i32, i32
  }
  func.func @transform_2(%arg0: i32, %arg1: i32) -> (i32, i32, i32) {
    %c0_i32 = arith.constant 0 : i32
    %c0_i32_0 = arith.constant 0 : i32
    %c0_i32_1 = arith.constant 0 : i32
    return %arg0, %c0_i32, %c0_i32_0 : i32, i32, i32
  }
}

module attributes {stable_mosaic.version = 11 : i64} {
  func.func @_sums_kernel(%arg0: i32, %arg1: i32, %arg2: memref<16x128xf32, #tpu.memory_space<vmem>>, %arg3: memref<16x128xf32, #tpu.memory_space<vmem>>, %arg4: memref<1x24x128xf32, #tpu.memory_space<vmem>>) attributes {dimension_semantics = [#tpu.dimension_semantics<parallel>, #tpu.dimension_semantics<arbitrary>], iteration_bounds = array<i64: 2, 1>, scalar_prefetch = 0 : i64, scratch_operands = 0 : i64, tpu.core_type = #tpu.core_type<tc>, window_params = [{transform_indices = @transform_0, window_bounds = array<i64: 16, 128>}, {transform_indices = @transform_1, window_bounds = array<i64: 16, 128>}, {transform_indices = @transform_2, window_bounds = array<i64: 1, 24, 128>}]} {
    %c0_i32 = arith.constant 0 : i32
    %0 = arith.cmpi eq, %arg1, %c0_i32 : i32
    %1 = arith.extui %0 : i1 to i32
    %c0_i32_0 = arith.constant 0 : i32
    %2 = arith.cmpi ne, %1, %c0_i32_0 : i32
    scf.if %2 {
      %cst_25 = arith.constant 0.000000e+00 : f32
      %44 = vector.broadcast %cst_25 : f32 to vector<24x128xf32>
      %c0_26 = arith.constant 0 : index
      %c0_27 = arith.constant 0 : index
      %c0_28 = arith.constant 0 : index
      %45 = vector.load %arg4[%c0_26, %c0_27, %c0_28] : memref<1x24x128xf32, #tpu.memory_space<vmem>>, vector<1x24x128xf32>
      %46 = vector.shape_cast %45 : vector<1x24x128xf32> to vector<24x128xf32>
      %47 = vector.shape_cast %44 : vector<24x128xf32> to vector<1x24x128xf32>
      tpu.vector_store %arg4[%c0_26, %c0_27, %c0_28], %47 {strides = array<i32>} : memref<1x24x128xf32, #tpu.memory_space<vmem>>, vector<1x24x128xf32>,
    } else {
    }
    %c0 = arith.constant 0 : index
    %c0_1 = arith.constant 0 : index
    %3 = vector.load %arg2[%c0, %c0_1] : memref<16x128xf32, #tpu.memory_space<vmem>>, vector<16x128xf32>
    %c0_2 = arith.constant 0 : index
    %c0_3 = arith.constant 0 : index
    %4 = vector.load %arg3[%c0_2, %c0_3] : memref<16x128xf32, #tpu.memory_space<vmem>>, vector<16x128xf32>
    %c1_i32 = arith.constant 1 : i32
    %5 = arith.muli %arg0, %c1_i32 : i32
    %6 = arith.addi %5, %arg1 : i32
    %c16_i32 = arith.constant 16 : i32
    %7 = arith.muli %6, %c16_i32 : i32
    %8 = tpu.iota {dimensions = array<i32: 0>} : vector<16x128xi32>
    %9 = vector.broadcast %7 : i32 to vector<16x128xi32>
    %10 = arith.addi %9, %8 : vector<16x128xi32>
    %c16_i32_4 = arith.constant 16 : i32
    %11 = vector.broadcast %c16_i32_4 : i32 to vector<16x128xi32>
    %12 = arith.cmpi slt, %10, %11 : vector<16x128xi32>
    %cst = arith.constant 0.000000e+00 : f32
    %13 = vector.broadcast %cst : f32 to vector<16x128xf32>
    %14 = arith.select %12, %3, %13 : vector<16x128xi1>, vector<16x128xf32>
    %cst_5 = arith.constant 0.000000e+00 : f32
    %15 = vector.broadcast %cst_5 : f32 to vector<16x128xf32>
    %16 = arith.select %12, %4, %15 : vector<16x128xi1>, vector<16x128xf32>
    %17 = arith.mulf %14, %16 : vector<16x128xf32>
    %c0_6 = arith.constant 0 : index
    %c0_7 = arith.constant 0 : index
    %c0_8 = arith.constant 0 : index
    %18 = vector.load %arg4[%c0_6, %c0_7, %c0_8] : memref<1x24x128xf32, #tpu.memory_space<vmem>>, vector<1x8x128xf32>
    %19 = vector.shape_cast %18 : vector<1x8x128xf32> to vector<8x128xf32>
    %20 = vector.shape_cast %17 : vector<16x128xf32> to vector<2x8x128xf32>
    %cst_9 = arith.constant dense<0.000000e+00> : vector<8x128xf32>
    %21 = vector.multi_reduction <add>, %20, %cst_9 [0] : vector<2x8x128xf32> to vector<8x128xf32>
    %22 = arith.addf %19, %21 : vector<8x128xf32>
    %c0_10 = arith.constant 0 : index
    %c0_11 = arith.constant 0 : index
    %c0_12 = arith.constant 0 : index
    %23 = vector.load %arg4[%c0_10, %c0_11, %c0_12] : memref<1x24x128xf32, #tpu.memory_space<vmem>>, vector<1x8x128xf32>
    %24 = vector.shape_cast %23 : vector<1x8x128xf32> to vector<8x128xf32>
    %25 = vector.shape_cast %22 : vector<8x128xf32> to vector<1x8x128xf32>
    tpu.vector_store %arg4[%c0_10, %c0_11, %c0_12], %25 {strides = array<i32>} : memref<1x24x128xf32, #tpu.memory_space<vmem>>, vector<1x8x128xf32>,
    %26 = arith.mulf %14, %14 : vector<16x128xf32>
    %c0_13 = arith.constant 0 : index
    %c8 = arith.constant 8 : index
    %c0_14 = arith.constant 0 : index
    %27 = vector.load %arg4[%c0_13, %c8, %c0_14] : memref<1x24x128xf32, #tpu.memory_space<vmem>>, vector<1x8x128xf32>
    %28 = vector.shape_cast %27 : vector<1x8x128xf32> to vector<8x128xf32>
    %29 = vector.shape_cast %26 : vector<16x128xf32> to vector<2x8x128xf32>
    %cst_15 = arith.constant dense<0.000000e+00> : vector<8x128xf32>
    %30 = vector.multi_reduction <add>, %29, %cst_15 [0] : vector<2x8x128xf32> to vector<8x128xf32>
    %31 = arith.addf %28, %30 : vector<8x128xf32>
    %c0_16 = arith.constant 0 : index
    %c8_17 = arith.constant 8 : index
    %c0_18 = arith.constant 0 : index
    %32 = vector.load %arg4[%c0_16, %c8_17, %c0_18] : memref<1x24x128xf32, #tpu.memory_space<vmem>>, vector<1x8x128xf32>
    %33 = vector.shape_cast %32 : vector<1x8x128xf32> to vector<8x128xf32>
    %34 = vector.shape_cast %31 : vector<8x128xf32> to vector<1x8x128xf32>
    tpu.vector_store %arg4[%c0_16, %c8_17, %c0_18], %34 {strides = array<i32>} : memref<1x24x128xf32, #tpu.memory_space<vmem>>, vector<1x8x128xf32>,
    %35 = arith.mulf %16, %16 : vector<16x128xf32>
    %c0_19 = arith.constant 0 : index
    %c16 = arith.constant 16 : index
    %c0_20 = arith.constant 0 : index
    %36 = vector.load %arg4[%c0_19, %c16, %c0_20] : memref<1x24x128xf32, #tpu.memory_space<vmem>>, vector<1x8x128xf32>
    %37 = vector.shape_cast %36 : vector<1x8x128xf32> to vector<8x128xf32>
    %38 = vector.shape_cast %35 : vector<16x128xf32> to vector<2x8x128xf32>
    %cst_21 = arith.constant dense<0.000000e+00> : vector<8x128xf32>
    %39 = vector.multi_reduction <add>, %38, %cst_21 [0] : vector<2x8x128xf32> to vector<8x128xf32>
    %40 = arith.addf %37, %39 : vector<8x128xf32>
    %c0_22 = arith.constant 0 : index
    %c16_23 = arith.constant 16 : index
    %c0_24 = arith.constant 0 : index
    %41 = vector.load %arg4[%c0_22, %c16_23, %c0_24] : memref<1x24x128xf32, #tpu.memory_space<vmem>>, vector<1x8x128xf32>
    %42 = vector.shape_cast %41 : vector<1x8x128xf32> to vector<8x128xf32>
    %43 = vector.shape_cast %40 : vector<8x128xf32> to vector<1x8x128xf32>
    tpu.vector_store %arg4[%c0_22, %c16_23, %c0_24], %43 {strides = array<i32>} : memref<1x24x128xf32, #tpu.memory_space<vmem>>, vector<1x8x128xf32>,
    return
  }
  func.func @transform_0(%arg0: i32, %arg1: i32) -> (i32, i32) {
    %c1_i32 = arith.constant 1 : i32
    %0 = arith.muli %arg0, %c1_i32 : i32
    %1 = arith.addi %0, %arg1 : i32
    %c0_i32 = arith.constant 0 : i32
    %2 = arith.minsi %1, %c0_i32 : i32
    %c0_i32_0 = arith.constant 0 : i32
    %c0_i32_1 = arith.constant 0 : i32
    return %2, %c0_i32_0 : i32, i32
  }
  func.func @transform_1(%arg0: i32, %arg1: i32) -> (i32, i32) {
    %c1_i32 = arith.constant 1 : i32
    %0 = arith.muli %arg0, %c1_i32 : i32
    %1 = arith.addi %0, %arg1 : i32
    %c0_i32 = arith.constant 0 : i32
    %2 = arith.minsi %1, %c0_i32 : i32
    %c0_i32_0 = arith.constant 0 : i32
    %c0_i32_1 = arith.constant 0 : i32
    return %2, %c0_i32_0 : i32, i32
  }
  func.func @transform_2(%arg0: i32, %arg1: i32) -> (i32, i32, i32) {
    %c0_i32 = arith.constant 0 : i32
    %c0_i32_0 = arith.constant 0 : i32
    %c0_i32_1 = arith.constant 0 : i32
    return %arg0, %c0_i32, %c0_i32_0 : i32, i32, i32
  }
}

</mosaic_0001>

<llo_original>
// kernel: dice_loss_lv_2d_3d.2
$region0: #{dice_loss_lv_2d_3d.2}
  #allocation0 [shape = 'u32[]', space=smem, size = 0x4, offset = 0x4, fixed_abs, tag = 'smem constant byte address 0x4 - core index']
  #allocation1 [shape = 'u32[144,128]{1,0:T(1,128)}', space=vmem, size = 0x12000, scoped, tag = 'internal scratch']
  %s0 = inlined_call_operand.vmem [shape: f32[16,128], index: 0, kind: input, shape index: {}]
  %s1 = inlined_call_operand.vmem [shape: f32[16,128], index: 1, kind: input, shape index: {}]
  %s2 = inlined_call_operand.vmem [shape: f32[2,24,128], index: 2, kind: output, shape index: {}]
  %s3 = sld [smem:[#allocation0]]
  $region45: #{dice_loss_lv_2d_3d.2} parent=0
    _
  %s5 = ssub.s32 1, %s3
  %s6 = scalar_select 0, %s5, %s3
  loop: start=0, step=1, limit=4
  $region2: #{dice_loss_lv_2d_3d.2} parent=0 // loop_pre_header
    _
  $region3: #{dice_loss_lv_2d_3d.2} parent=0 // loop_header
    %s8 = sphi 0, %s12
    %p9 = scmp.ge.s32.totalorder %s8, 4
    %s15 = sphi 0, %s27
    %s16 = sphi 0, %s23
    %s17 = sphi 0, %s15
    %s18 = sphi 0, %s16
    %s19 = sphi 0, %s17
    %s20 = sphi 0, %s18
    %s36 = sphi 0, %s38
    %s39 = sphi 0, %s36
    %s40 = sphi 0, %s39
    %s56 = sphi 0, %s40
    %s68 = sphi 0, %s70
    %s71 = sphi 0, %s68
    %s72 = sphi 0, %s71
    %s88 = sphi 0, %s72
    %s94 = sphi 0, %s96
    %s97 = sphi 0, %s94
    %s98 = sphi 0, %s97
    %s114 = sphi 0, %s98
  $region4: #{dice_loss_lv_2d_3d.2} parent=0 // loop_header_branch
    %11 = sbr.rel (%p9) target = $region8
  $region5: #{dice_loss_lv_2d_3d.2} parent=0 // loop_body
    %s13 = ssub.s32 %s8, 1
    %s14 = ssub.s32 %s8, 2
    %s21 = sadd.s32 1, %s16
    %p22 = scmp.ge.s32.totalorder %s21, 1
    %s23 = scalar_select %p22, 0, %s21
    %s24 = sadd.s32 1, %s15
    %s25 = scalar_select %p22, %s24, %s15
    %p26 = scmp.ge.s32.totalorder %s25, 2
    %s27 = scalar_select %p26, 0, %s25
    %s28 = sadd.s32 %s15, %s16
    %p29 = scmp.lt.s32.totalorder %s28, 0
    %s30 = scalar_select %p29, %s28, 0
    %s31 = sadd.s32 %s27, %s23
    %p32 = scmp.lt.s32.totalorder %s31, 0
    %s33 = scalar_select %p32, %s31, 0
    %s34 = ssub.s32 %s30, %s33
    %p35 = scmp.eq.s32.totalorder %s34, 0
    %s37 = sadd.s32 %s36, 1
    %s38 = scalar_select %p35, %s36, %s37
    %p41 = pneg %p35
    %p42 = scmp.eq.s32.totalorder %s8, 1
    %p43 = por %p41, %p42
    %p44 = scmp.ne.s32.totalorder %s36, %s39
    %p45 = scmp.eq.s32.totalorder %s8, 0
    %p46 = por %p44, %p45
    %p47 = scmp.ne.s32.totalorder %s36, %s39
    %p48 = scmp.eq.s32.totalorder %s13, 1
    %p49 = por %p47, %p48
    %p50 = scmp.ne.s32.totalorder %s39, %s40
    %p51 = scmp.eq.s32.totalorder %s13, 0
    %p52 = por %p50, %p51
    %p53 = scmp.ne.s32.totalorder %s39, %s40
    %p54 = scmp.eq.s32.totalorder %s14, 1
    %p55 = por %p53, %p54
    %p57 = scmp.ne.s32.totalorder %s40, %s56
    %p58 = scmp.eq.s32.totalorder %s14, 0
    %p59 = por %p57, %p58
    %s60 = sadd.s32 %s15, %s16
    %p61 = scmp.lt.s32.totalorder %s60, 0
    %s62 = scalar_select %p61, %s60, 0
    %s63 = sadd.s32 %s27, %s23
    %p64 = scmp.lt.s32.totalorder %s63, 0
    %s65 = scalar_select %p64, %s63, 0
    %s66 = ssub.s32 %s62, %s65
    %p67 = scmp.eq.s32.totalorder %s66, 0
    %s69 = sadd.s32 %s68, 1
    %s70 = scalar_select %p67, %s68, %s69
    %p73 = pneg %p67
    %p74 = scmp.eq.s32.totalorder %s8, 1
    %p75 = por %p73, %p74
    %p76 = scmp.ne.s32.totalorder %s68, %s71
    %p77 = scmp.eq.s32.totalorder %s8, 0
    %p78 = por %p76, %p77
    %p79 = scmp.ne.s32.totalorder %s68, %s71
    %p80 = scmp.eq.s32.totalorder %s13, 1
    %p81 = por %p79, %p80
    %p82 = scmp.ne.s32.totalorder %s71, %s72
    %p83 = scmp.eq.s32.totalorder %s13, 0
    %p84 = por %p82, %p83
    %p85 = scmp.ne.s32.totalorder %s71, %s72
    %p86 = scmp.eq.s32.totalorder %s14, 1
    %p87 = por %p85, %p86
    %p89 = scmp.ne.s32.totalorder %s72, %s88
    %p90 = scmp.eq.s32.totalorder %s14, 0
    %p91 = por %p89, %p90
    %s92 = ssub.s32 %s15, %s27
    %p93 = scmp.eq.s32.totalorder %s92, 0
    %s95 = sadd.s32 %s94, 1
    %s96 = scalar_select %p93, %s94, %s95
    %p99 = pneg %p93
    %p100 = scmp.eq.s32.totalorder %s8, 1
    %p101 = por %p99, %p100
    %p102 = scmp.ne.s32.totalorder %s94, %s97
    %p103 = scmp.eq.s32.totalorder %s8, 0
    %p104 = por %p102, %p103
    %p105 = scmp.ne.s32.totalorder %s94, %s97
    %p106 = scmp.eq.s32.totalorder %s13, 1
    %p107 = por %p105, %p106
    %p108 = scmp.ne.s32.totalorder %s97, %s98
    %p109 = scmp.eq.s32.totalorder %s13, 0
    %p110 = por %p108, %p109
    %p111 = scmp.ne.s32.totalorder %s97, %s98
    %p112 = scmp.eq.s32.totalorder %s14, 1
    %p113 = por %p111, %p112
    %p115 = scmp.ne.s32.totalorder %s98, %s114
    %p116 = scmp.eq.s32.totalorder %s14, 0
    %p117 = por %p115, %p116
    %p118 = scmp.le.s32.totalorder 1, %s8
    %p119 = scmp.lt.s32.totalorder %s8, 3
    %p120 = pnand %p118, %p119
    %p121 = pneg %p120
    // Predicated region
    $region9: #{dice_loss_lv_2d_3d.2} parent=5 // pred_check
      _
    $region10: #{dice_loss_lv_2d_3d.2} parent=5 // pred_check_branch
      %123 = sbr.rel (%p120) target = $region12
    $region11: #{dice_loss_lv_2d_3d.2} parent=5 // pred_region
      %s124 = ssub.s32 %s8, 1
    $region12: #{dice_loss_lv_2d_3d.2} parent=5 // pred_fallthru
      _
    %p125 = scmp.lt.s32.totalorder %s8, 2
    // Predicated region
    $region13: #{dice_loss_lv_2d_3d.2} parent=5 // pred_check
      %p126 = pneg %p125
    $region14: #{dice_loss_lv_2d_3d.2} parent=5 // pred_check_branch
      %128 = sbr.rel (%p126) target = $region16
    $region15: #{dice_loss_lv_2d_3d.2} parent=5 // pred_region
      // Predicated region
      $region17: #{dice_loss_lv_2d_3d.2} parent=15 // pred_check
        %p129 = pneg %p46
      $region18: #{dice_loss_lv_2d_3d.2} parent=15 // pred_check_branch
        %131 = sbr.rel (%p129) target = $region20
      $region19: #{dice_loss_lv_2d_3d.2} parent=15 // pred_region
        %s132 = sadd.s32 %s15, %s16
        %p133 = scmp.lt.s32.totalorder %s132, 0
        %s134 = scalar_select %p133, %s132, 0
        %s135 = smul.u32 2, %s134
        %p136 = scmp.lt.s32.totalorder %s135, 1
        %s137 = scalar_select %p136, %s135, 1
        %s138 = smul.addr %s137, 8
        %s139 = scalar_lea.vmem %s0, %s138
        %s140 = sadd.s32 %s15, %s16
        %p141 = scmp.lt.s32.totalorder %s140, 0
        %s142 = scalar_select %p141, %s140, 0
        %s143 = smul.u32 2, %s142
      $region20: #{dice_loss_lv_2d_3d.2} parent=15 // pred_fallthru
        _
      // Predicated region
      $region21: #{dice_loss_lv_2d_3d.2} parent=15 // pred_check
        %p144 = pneg %p78
      $region22: #{dice_loss_lv_2d_3d.2} parent=15 // pred_check_branch
        %146 = sbr.rel (%p144) target = $region24
      $region23: #{dice_loss_lv_2d_3d.2} parent=15 // pred_region
        %s147 = sadd.s32 %s15, %s16
        %p148 = scmp.lt.s32.totalorder %s147, 0
        %s149 = scalar_select %p148, %s147, 0
        %s150 = smul.u32 2, %s149
        %p151 = scmp.lt.s32.totalorder %s150, 1
        %s152 = scalar_select %p151, %s150, 1
        %s153 = smul.addr %s152, 8
        %s154 = scalar_lea.vmem %s1, %s153
        %s155 = sadd.s32 %s15, %s16
        %p156 = scmp.lt.s32.totalorder %s155, 0
        %s157 = scalar_select %p156, %s155, 0
        %s158 = smul.u32 2, %s157
      $region24: #{dice_loss_lv_2d_3d.2} parent=15 // pred_fallthru
        _
    $region16: #{dice_loss_lv_2d_3d.2} parent=5 // pred_fallthru
      _
    %p159 = scmp.le.s32.totalorder 1, %s8
    %p160 = scmp.lt.s32.totalorder %s8, 3
    %p161 = pnand %p159, %p160
    %p162 = pneg %p161
    // Predicated region
    $region25: #{dice_loss_lv_2d_3d.2} parent=5 // pred_check
      _
    $region26: #{dice_loss_lv_2d_3d.2} parent=5 // pred_check_branch
      %164 = sbr.rel (%p161) target = $region28
    $region27: #{dice_loss_lv_2d_3d.2} parent=5 // pred_region
      %s165 = ssub.s32 %s8, 1
      %s166 = sadd.s32 %s17, %s18
      %p167 = scmp.lt.s32.totalorder %s166, 0
      %s168 = scalar_select %p167, %s166, 0
      %s169 = smul.u32 2, %s168
      %p170 = scmp.lt.s32.totalorder %s169, 1
      %s171 = scalar_select %p170, %s169, 1
      %s172 = smul.addr %s171, 8
      %s173 = scalar_lea.vmem %s0, %s172
      %p174 = pneg %p52
      %p175 = pneg %p49
      %s176 = sadd.s32 %s17, %s18
      %p177 = scmp.lt.s32.totalorder %s176, 0
      %s178 = scalar_select %p177, %s176, 0
      %s179 = smul.u32 2, %s178
      %p180 = scmp.lt.s32.totalorder %s179, 1
      %s181 = scalar_select %p180, %s179, 1
      %s182 = smul.addr %s181, 8
      %s183 = scalar_lea.vmem %s1, %s182
      %p184 = pneg %p84
      %p185 = pneg %p81
      %p186 = pneg %p110
      %p187 = pneg %p107
      %p188 = scmp.lt.s32.totalorder %s17, 1
      %s189 = scalar_select %p188, %s17, 1
      %s190 = smul.addr %s189, 3
      %s191 = smul.addr %s190, 8
      %s192 = scalar_lea.vmem %s2, %s191
      %s193 = sadd.s32 %s17, %s18
      %p194 = scmp.lt.s32.totalorder %s193, 0
      %s195 = scalar_select %p194, %s193, 0
      %s196 = smul.u32 2, %s195
      %p197 = scmp.lt.s32.totalorder %s196, 1
      %s198 = scalar_select %p197, %s196, 1
      %s199 = smul.addr %s198, 8
      %s200 = scalar_lea.vmem %s0, %s199
      %s201 = sadd.s32 %s17, %s18
      %p202 = scmp.lt.s32.totalorder %s201, 0
      %s203 = scalar_select %p202, %s201, 0
      %s204 = smul.u32 2, %s203
      %s205 = sadd.s32 %s17, %s18
      %p206 = scmp.lt.s32.totalorder %s205, 0
      %s207 = scalar_select %p206, %s205, 0
      %s208 = smul.u32 2, %s207
      %p209 = scmp.lt.s32.totalorder %s208, 1
      %s210 = scalar_select %p209, %s208, 1
      %s211 = smul.addr %s210, 8
      %s212 = scalar_lea.vmem %s1, %s211
      %s213 = sadd.s32 %s17, %s18
      %p214 = scmp.lt.s32.totalorder %s213, 0
      %s215 = scalar_select %p214, %s213, 0
      %s216 = smul.u32 2, %s215
      %p217 = scmp.lt.s32.totalorder %s17, 1
      %s218 = scalar_select %p217, %s17, 1
      %s219 = smul.addr %s218, 3
      %s220 = smul.addr %s219, 8
      %s221 = scalar_lea.vmem %s2, %s220
      %p222 = scmp.eq.s32.totalorder %s18, 0
      // Predicated region
      $region29: #{dice_loss_lv_2d_3d.2} parent=27 // pred_check
        %p223 = pneg %p222
      $region30: #{dice_loss_lv_2d_3d.2} parent=27 // pred_check_branch
        %225 = sbr.rel (%p223) target = $region32
      $region31: #{dice_loss_lv_2d_3d.2} parent=27 // pred_region
        %226 = vst [vmem:[%s221] sm:$0xff] 0.0
        %227 = vst [vmem:[%s221 + $0x8] sm:$0xff] 0.0
        %228 = vst [vmem:[%s221 + $0x10] sm:$0xff] 0.0
      $region32: #{dice_loss_lv_2d_3d.2} parent=27 // pred_fallthru
        _
      %v229 = vld [vmem:[%s200] sm:$0xff]
      %v230 = vld [vmem:[%s200 + $0x8] sm:$0xff]
      %v231 = vld [vmem:[%s212] sm:$0xff]
      %v232 = vld [vmem:[%s212 + $0x8] sm:$0xff]
      %s233 = sadd.s32 %s17, %s18
      %s234 = smul.u32 %s233, 16
      %v235 = vlaneseq
      %v236 = vshrl.u32 %v235, 7
      %v237 = vadd.s32 %v236, 8
      %v238 = vstv %s234
      %v239 = vadd.s32 %v238, %v236
      %v240 = vadd.s32 %v238, %v237
      %vm241 = vcmp.lt.s32.totalorder %v239, 16
      %vm242 = vcmp.lt.s32.totalorder %v240, 16
      %v243 = vsel %vm241, %v229, 0.0
      %v244 = vsel %vm242, %v230, 0.0
      %v245 = vsel %vm241, %v231, 0.0
      %v246 = vsel %vm242, %v232, 0.0
      %v247 = vmul.f32 %v243, %v245
      %v248 = vmul.f32 %v244, %v246
      %v249 = vld [vmem:[%s221] sm:$0xff]
      %v250 = vadd.f32 %v247, %v248
      %v251 = vadd.f32 %v249, %v250
      %252 = vst [vmem:[%s221] sm:$0xff] %v251
      %v253 = vmul.f32 %v243, %v243
      %v254 = vmul.f32 %v244, %v244
      %v255 = vld [vmem:[%s221 + $0x8] sm:$0xff]
      %v256 = vadd.f32 %v253, %v254
      %v257 = vadd.f32 %v255, %v256
      %258 = vst [vmem:[%s221 + $0x8] sm:$0xff] %v257
      %v259 = vmul.f32 %v245, %v245
      %v260 = vmul.f32 %v246, %v246
      %v261 = vld [vmem:[%s221 + $0x10] sm:$0xff]
      %v262 = vadd.f32 %v259, %v260
      %v263 = vadd.f32 %v261, %v262
      %264 = vst [vmem:[%s221 + $0x10] sm:$0xff] %v263
      %p265 = scmp.lt.s32.totalorder %s17, 1
      %s266 = scalar_select %p265, %s17, 1
      %s267 = smul.addr %s266, 3
      %s268 = smul.addr %s267, 8
      %s269 = scalar_lea.vmem %s2, %s268
      // Predicated region
      $region33: #{dice_loss_lv_2d_3d.2} parent=27 // pred_check
        %p270 = pneg %p107
      $region34: #{dice_loss_lv_2d_3d.2} parent=27 // pred_check_branch
        %272 = sbr.rel (%p270) target = $region36
      $region35: #{dice_loss_lv_2d_3d.2} parent=27 // pred_region
        _
      $region36: #{dice_loss_lv_2d_3d.2} parent=27 // pred_fallthru
        _
    $region28: #{dice_loss_lv_2d_3d.2} parent=5 // pred_fallthru
      _
    %p273 = scmp.le.s32.totalorder 2, %s8
    // Predicated region
    $region37: #{dice_loss_lv_2d_3d.2} parent=5 // pred_check
      %p274 = pneg %p273
    $region38: #{dice_loss_lv_2d_3d.2} parent=5 // pred_check_branch
      %276 = sbr.rel (%p274) target = $region40
    $region39: #{dice_loss_lv_2d_3d.2} parent=5 // pred_region
      %s277 = ssub.s32 %s8, 2
      // Predicated region
      $region41: #{dice_loss_lv_2d_3d.2} parent=39 // pred_check
        %p278 = pneg %p113
      $region42: #{dice_loss_lv_2d_3d.2} parent=39 // pred_check_branch
        %280 = sbr.rel (%p278) target = $region44
      $region43: #{dice_loss_lv_2d_3d.2} parent=39 // pred_region
        %p281 = scmp.lt.s32.totalorder %s19, 1
        %s282 = scalar_select %p281, %s19, 1
        %s283 = smul.addr %s282, 3
        %s284 = smul.addr %s283, 8
        %s285 = scalar_lea.vmem %s2, %s284
      $region44: #{dice_loss_lv_2d_3d.2} parent=39 // pred_fallthru
        _
    $region40: #{dice_loss_lv_2d_3d.2} parent=5 // pred_fallthru
      _
  $region6: #{dice_loss_lv_2d_3d.2} parent=0 // loop_footer
    %s12 = sadd.s32 1, %s8
  $region7: #{dice_loss_lv_2d_3d.2} parent=0 // loop_footer_branch
    %7 = sbr.rel target = $region3
  $region8: #{dice_loss_lv_2d_3d.2} parent=0 // loop_exit
    _

// kernel: dice_loss_lv_2d_3d.3
$region0: #{dice_loss_lv_2d_3d.3}
  #allocation0 [shape = 'u32[]', space=smem, size = 0x4, offset = 0x4, fixed_abs, tag = 'smem constant byte address 0x4 - core index']
  #allocation1 [shape = 'u32[144,128]{1,0:T(1,128)}', space=vmem, size = 0x12000, scoped, tag = 'internal scratch']
  %s0 = inlined_call_operand.vmem [shape: f32[128,128], index: 0, kind: input, shape index: {}]
  %s1 = inlined_call_operand.vmem [shape: f32[128,128], index: 1, kind: input, shape index: {}]
  %s2 = inlined_call_operand.vmem [shape: f32[2,24,128], index: 2, kind: output, shape index: {}]
  %s3 = sld [smem:[#allocation0]]
  $region45: #{dice_loss_lv_2d_3d.3} parent=0
    _
  %s5 = ssub.s32 1, %s3
  %s6 = scalar_select 0, %s5, %s3
  loop: start=0, step=1, limit=4
  $region2: #{dice_loss_lv_2d_3d.3} parent=0 // loop_pre_header
    _
  $region3: #{dice_loss_lv_2d_3d.3} parent=0 // loop_header
    %s8 = sphi 0, %s12
    %p9 = scmp.ge.s32.totalorder %s8, 4
    %s15 = sphi 0, %s27
    %s16 = sphi 0, %s23
    %s17 = sphi 0, %s15
    %s18 = sphi 0, %s16
    %s19 = sphi 0, %s17
    %s20 = sphi 0, %s18
    %s36 = sphi 0, %s38
    %s39 = sphi 0, %s36
    %s40 = sphi 0, %s39
    %s56 = sphi 0, %s40
    %s68 = sphi 0, %s70
    %s71 = sphi 0, %s68
    %s72 = sphi 0, %s71
    %s88 = sphi 0, %s72
    %s94 = sphi 0, %s96
    %s97 = sphi 0, %s94
    %s98 = sphi 0, %s97
    %s114 = sphi 0, %s98
  $region4: #{dice_loss_lv_2d_3d.3} parent=0 // loop_header_branch
    %11 = sbr.rel (%p9) target = $region8
  $region5: #{dice_loss_lv_2d_3d.3} parent=0 // loop_body
    %s13 = ssub.s32 %s8, 1
    %s14 = ssub.s32 %s8, 2
    %s21 = sadd.s32 1, %s16
    %p22 = scmp.ge.s32.totalorder %s21, 1
    %s23 = scalar_select %p22, 0, %s21
    %s24 = sadd.s32 1, %s15
    %s25 = scalar_select %p22, %s24, %s15
    %p26 = scmp.ge.s32.totalorder %s25, 2
    %s27 = scalar_select %p26, 0, %s25
    %s28 = sadd.s32 %s15, %s16
    %p29 = scmp.lt.s32.totalorder %s28, 0
    %s30 = scalar_select %p29, %s28, 0
    %s31 = sadd.s32 %s27, %s23
    %p32 = scmp.lt.s32.totalorder %s31, 0
    %s33 = scalar_select %p32, %s31, 0
    %s34 = ssub.s32 %s30, %s33
    %p35 = scmp.eq.s32.totalorder %s34, 0
    %s37 = sadd.s32 %s36, 1
    %s38 = scalar_select %p35, %s36, %s37
    %p41 = pneg %p35
    %p42 = scmp.eq.s32.totalorder %s8, 1
    %p43 = por %p41, %p42
    %p44 = scmp.ne.s32.totalorder %s36, %s39
    %p45 = scmp.eq.s32.totalorder %s8, 0
    %p46 = por %p44, %p45
    %p47 = scmp.ne.s32.totalorder %s36, %s39
    %p48 = scmp.eq.s32.totalorder %s13, 1
    %p49 = por %p47, %p48
    %p50 = scmp.ne.s32.totalorder %s39, %s40
    %p51 = scmp.eq.s32.totalorder %s13, 0
    %p52 = por %p50, %p51
    %p53 = scmp.ne.s32.totalorder %s39, %s40
    %p54 = scmp.eq.s32.totalorder %s14, 1
    %p55 = por %p53, %p54
    %p57 = scmp.ne.s32.totalorder %s40, %s56
    %p58 = scmp.eq.s32.totalorder %s14, 0
    %p59 = por %p57, %p58
    %s60 = sadd.s32 %s15, %s16
    %p61 = scmp.lt.s32.totalorder %s60, 0
    %s62 = scalar_select %p61, %s60, 0
    %s63 = sadd.s32 %s27, %s23
    %p64 = scmp.lt.s32.totalorder %s63, 0
    %s65 = scalar_select %p64, %s63, 0
    %s66 = ssub.s32 %s62, %s65
    %p67 = scmp.eq.s32.totalorder %s66, 0
    %s69 = sadd.s32 %s68, 1
    %s70 = scalar_select %p67, %s68, %s69
    %p73 = pneg %p67
    %p74 = scmp.eq.s32.totalorder %s8, 1
    %p75 = por %p73, %p74
    %p76 = scmp.ne.s32.totalorder %s68, %s71
    %p77 = scmp.eq.s32.totalorder %s8, 0
    %p78 = por %p76, %p77
    %p79 = scmp.ne.s32.totalorder %s68, %s71
    %p80 = scmp.eq.s32.totalorder %s13, 1
    %p81 = por %p79, %p80
    %p82 = scmp.ne.s32.totalorder %s71, %s72
    %p83 = scmp.eq.s32.totalorder %s13, 0
    %p84 = por %p82, %p83
    %p85 = scmp.ne.s32.totalorder %s71, %s72
    %p86 = scmp.eq.s32.totalorder %s14, 1
    %p87 = por %p85, %p86
    %p89 = scmp.ne.s32.totalorder %s72, %s88
    %p90 = scmp.eq.s32.totalorder %s14, 0
    %p91 = por %p89, %p90
    %s92 = ssub.s32 %s15, %s27
    %p93 = scmp.eq.s32.totalorder %s92, 0
    %s95 = sadd.s32 %s94, 1
    %s96 = scalar_select %p93, %s94, %s95
    %p99 = pneg %p93
    %p100 = scmp.eq.s32.totalorder %s8, 1
    %p101 = por %p99, %p100
    %p102 = scmp.ne.s32.totalorder %s94, %s97
    %p103 = scmp.eq.s32.totalorder %s8, 0
    %p104 = por %p102, %p103
    %p105 = scmp.ne.s32.totalorder %s94, %s97
    %p106 = scmp.eq.s32.totalorder %s13, 1
    %p107 = por %p105, %p106
    %p108 = scmp.ne.s32.totalorder %s97, %s98
    %p109 = scmp.eq.s32.totalorder %s13, 0
    %p110 = por %p108, %p109
    %p111 = scmp.ne.s32.totalorder %s97, %s98
    %p112 = scmp.eq.s32.totalorder %s14, 1
    %p113 = por %p111, %p112
    %p115 = scmp.ne.s32.totalorder %s98, %s114
    %p116 = scmp.eq.s32.totalorder %s14, 0
    %p117 = por %p115, %p116
    %p118 = scmp.le.s32.totalorder 1, %s8
    %p119 = scmp.lt.s32.totalorder %s8, 3
    %p120 = pnand %p118, %p119
    %p121 = pneg %p120
    // Predicated region
    $region9: #{dice_loss_lv_2d_3d.3} parent=5 // pred_check
      _
    $region10: #{dice_loss_lv_2d_3d.3} parent=5 // pred_check_branch
      %123 = sbr.rel (%p120) target = $region12
    $region11: #{dice_loss_lv_2d_3d.3} parent=5 // pred_region
      %s124 = ssub.s32 %s8, 1
    $region12: #{dice_loss_lv_2d_3d.3} parent=5 // pred_fallthru
      _
    %p125 = scmp.lt.s32.totalorder %s8, 2
    // Predicated region
    $region13: #{dice_loss_lv_2d_3d.3} parent=5 // pred_check
      %p126 = pneg %p125
    $region14: #{dice_loss_lv_2d_3d.3} parent=5 // pred_check_branch
      %128 = sbr.rel (%p126) target = $region16
    $region15: #{dice_loss_lv_2d_3d.3} parent=5 // pred_region
      // Predicated region
      $region17: #{dice_loss_lv_2d_3d.3} parent=15 // pred_check
        %p129 = pneg %p46
      $region18: #{dice_loss_lv_2d_3d.3} parent=15 // pred_check_branch
        %131 = sbr.rel (%p129) target = $region20
      $region19: #{dice_loss_lv_2d_3d.3} parent=15 // pred_region
        %s132 = sadd.s32 %s15, %s16
        %p133 = scmp.lt.s32.totalorder %s132, 0
        %s134 = scalar_select %p133, %s132, 0
        %s135 = smul.u32 16, %s134
        %p136 = scmp.lt.s32.totalorder %s135, 15
        %s137 = scalar_select %p136, %s135, 15
        %s138 = smul.addr %s137, 8
        %s139 = scalar_lea.vmem %s0, %s138
        %s140 = sadd.s32 %s15, %s16
        %p141 = scmp.lt.s32.totalorder %s140, 0
        %s142 = scalar_select %p141, %s140, 0
        %s143 = smul.u32 16, %s142
      $region20: #{dice_loss_lv_2d_3d.3} parent=15 // pred_fallthru
        _
      // Predicated region
      $region21: #{dice_loss_lv_2d_3d.3} parent=15 // pred_check
        %p144 = pneg %p78
      $region22: #{dice_loss_lv_2d_3d.3} parent=15 // pred_check_branch
        %146 = sbr.rel (%p144) target = $region24
      $region23: #{dice_loss_lv_2d_3d.3} parent=15 // pred_region
        %s147 = sadd.s32 %s15, %s16
        %p148 = scmp.lt.s32.totalorder %s147, 0
        %s149 = scalar_select %p148, %s147, 0
        %s150 = smul.u32 16, %s149
        %p151 = scmp.lt.s32.totalorder %s150, 15
        %s152 = scalar_select %p151, %s150, 15
        %s153 = smul.addr %s152, 8
        %s154 = scalar_lea.vmem %s1, %s153
        %s155 = sadd.s32 %s15, %s16
        %p156 = scmp.lt.s32.totalorder %s155, 0
        %s157 = scalar_select %p156, %s155, 0
        %s158 = smul.u32 16, %s157
      $region24: #{dice_loss_lv_2d_3d.3} parent=15 // pred_fallthru
        _
    $region16: #{dice_loss_lv_2d_3d.3} parent=5 // pred_fallthru
      _
    %p159 = scmp.le.s32.totalorder 1, %s8
    %p160 = scmp.lt.s32.totalorder %s8, 3
    %p161 = pnand %p159, %p160
    %p162 = pneg %p161
    // Predicated region
    $region25: #{dice_loss_lv_2d_3d.3} parent=5 // pred_check
      _
    $region26: #{dice_loss_lv_2d_3d.3} parent=5 // pred_check_branch
      %164 = sbr.rel (%p161) target = $region28
    $region27: #{dice_loss_lv_2d_3d.3} parent=5 // pred_region
      %s165 = ssub.s32 %s8, 1
      %s166 = sadd.s32 %s17, %s18
      %p167 = scmp.lt.s32.totalorder %s166, 0
      %s168 = scalar_select %p167, %s166, 0
      %s169 = smul.u32 16, %s168
      %p170 = scmp.lt.s32.totalorder %s169, 15
      %s171 = scalar_select %p170, %s169, 15
      %s172 = smul.addr %s171, 8
      %s173 = scalar_lea.vmem %s0, %s172
      %p174 = pneg %p52
      %p175 = pneg %p49
      %s176 = sadd.s32 %s17, %s18
      %p177 = scmp.lt.s32.totalorder %s176, 0
      %s178 = scalar_select %p177, %s176, 0
      %s179 = smul.u32 16, %s178
      %p180 = scmp.lt.s32.totalorder %s179, 15
      %s181 = scalar_select %p180, %s179, 15
      %s182 = smul.addr %s181, 8
      %s183 = scalar_lea.vmem %s1, %s182
      %p184 = pneg %p84
      %p185 = pneg %p81
      %p186 = pneg %p110
      %p187 = pneg %p107
      %p188 = scmp.lt.s32.totalorder %s17, 1
      %s189 = scalar_select %p188, %s17, 1
      %s190 = smul.addr %s189, 3
      %s191 = smul.addr %s190, 8
      %s192 = scalar_lea.vmem %s2, %s191
      %s193 = sadd.s32 %s17, %s18
      %p194 = scmp.lt.s32.totalorder %s193, 0
      %s195 = scalar_select %p194, %s193, 0
      %s196 = smul.u32 16, %s195
      %p197 = scmp.lt.s32.totalorder %s196, 15
      %s198 = scalar_select %p197, %s196, 15
      %s199 = smul.addr %s198, 8
      %s200 = scalar_lea.vmem %s0, %s199
      %s201 = sadd.s32 %s17, %s18
      %p202 = scmp.lt.s32.totalorder %s201, 0
      %s203 = scalar_select %p202, %s201, 0
      %s204 = smul.u32 16, %s203
      %s205 = sadd.s32 %s17, %s18
      %p206 = scmp.lt.s32.totalorder %s205, 0
      %s207 = scalar_select %p206, %s205, 0
      %s208 = smul.u32 16, %s207
      %p209 = scmp.lt.s32.totalorder %s208, 15
      %s210 = scalar_select %p209, %s208, 15
      %s211 = smul.addr %s210, 8
      %s212 = scalar_lea.vmem %s1, %s211
      %s213 = sadd.s32 %s17, %s18
      %p214 = scmp.lt.s32.totalorder %s213, 0
      %s215 = scalar_select %p214, %s213, 0
      %s216 = smul.u32 16, %s215
      %p217 = scmp.lt.s32.totalorder %s17, 1
      %s218 = scalar_select %p217, %s17, 1
      %s219 = smul.addr %s218, 3
      %s220 = smul.addr %s219, 8
      %s221 = scalar_lea.vmem %s2, %s220
      %p222 = scmp.eq.s32.totalorder %s18, 0
      // Predicated region
      $region29: #{dice_loss_lv_2d_3d.3} parent=27 // pred_check
        %p223 = pneg %p222
      $region30: #{dice_loss_lv_2d_3d.3} parent=27 // pred_check_branch
        %225 = sbr.rel (%p223) target = $region32
      $region31: #{dice_loss_lv_2d_3d.3} parent=27 // pred_region
        %226 = vst [vmem:[%s221] sm:$0xff] 0.0
        %227 = vst [vmem:[%s221 + $0x8] sm:$0xff] 0.0
        %228 = vst [vmem:[%s221 + $0x10] sm:$0xff] 0.0
      $region32: #{dice_loss_lv_2d_3d.3} parent=27 // pred_fallthru
        _
      %v229 = vld [vmem:[%s200] sm:$0xff]
      %v230 = vld [vmem:[%s200 + $0x8] sm:$0xff]
      %v231 = vld [vmem:[%s200 + $0x10] sm:$0xff]
      %v232 = vld [vmem:[%s200 + $0x18] sm:$0xff]
      %v233 = vld [vmem:[%s200 + $0x20] sm:$0xff]
      %v234 = vld [vmem:[%s200 + $0x28] sm:$0xff]
      %v235 = vld [vmem:[%s200 + $0x30] sm:$0xff]
      %v236 = vld [vmem:[%s200 + $0x38] sm:$0xff]
      %v237 = vld [vmem:[%s200 + $0x40] sm:$0xff]
      %v238 = vld [vmem:[%s200 + $0x48] sm:$0xff]
      %v239 = vld [vmem:[%s200 + $0x50] sm:$0xff]
      %v240 = vld [vmem:[%s200 + $0x58] sm:$0xff]
      %v241 = vld [vmem:[%s200 + $0x60] sm:$0xff]
      %v242 = vld [vmem:[%s200 + $0x68] sm:$0xff]
      %v243 = vld [vmem:[%s200 + $0x70] sm:$0xff]
      %v244 = vld [vmem:[%s200 + $0x78] sm:$0xff]
      %v245 = vld [vmem:[%s212] sm:$0xff]
      %v246 = vld [vmem:[%s212 + $0x8] sm:$0xff]
      %v247 = vld [vmem:[%s212 + $0x10] sm:$0xff]
      %v248 = vld [vmem:[%s212 + $0x18] sm:$0xff]
      %v249 = vld [vmem:[%s212 + $0x20] sm:$0xff]
      %v250 = vld [vmem:[%s212 + $0x28] sm:$0xff]
      %v251 = vld [vmem:[%s212 + $0x30] sm:$0xff]
      %v252 = vld [vmem:[%s212 + $0x38] sm:$0xff]
      %v253 = vld [vmem:[%s212 + $0x40] sm:$0xff]
      %v254 = vld [vmem:[%s212 + $0x48] sm:$0xff]
      %v255 = vld [vmem:[%s212 + $0x50] sm:$0xff]
      %v256 = vld [vmem:[%s212 + $0x58] sm:$0xff]
      %v257 = vld [vmem:[%s212 + $0x60] sm:$0xff]
      %v258 = vld [vmem:[%s212 + $0x68] sm:$0xff]
      %v259 = vld [vmem:[%s212 + $0x70] sm:$0xff]
      %v260 = vld [vmem:[%s212 + $0x78] sm:$0xff]
      %s261 = sadd.s32 %s17, %s18
      %s262 = smul.u32 %s261, 128
      %v263 = vlaneseq
      %v264 = vshrl.u32 %v263, 7
      %v265 = vadd.s32 %v264, 8
      %v266 = vadd.s32 %v264, 16
      %v267 = vadd.s32 %v264, 24
      %v268 = vadd.s32 %v264, 32
      %v269 = vadd.s32 %v264, 40
      %v270 = vadd.s32 %v264, 48
      %v271 = vadd.s32 %v264, 56
      %v272 = vadd.s32 %v264, 64
      %v273 = vadd.s32 %v264, 72
      %v274 = vadd.s32 %v264, 80
      %v275 = vadd.s32 %v264, 88
      %v276 = vadd.s32 %v264, 96
      %v277 = vadd.s32 %v264, 104
      %v278 = vadd.s32 %v264, 112
      %v279 = vadd.s32 %v264, 120
      %v280 = vstv %s262
      %v281 = vadd.s32 %v280, %v264
      %v282 = vadd.s32 %v280, %v265
      %v283 = vadd.s32 %v280, %v266
      %v284 = vadd.s32 %v280, %v267
      %v285 = vadd.s32 %v280, %v268
      %v286 = vadd.s32 %v280, %v269
      %v287 = vadd.s32 %v280, %v270
      %v288 = vadd.s32 %v280, %v271
      %v289 = vadd.s32 %v280, %v272
      %v290 = vadd.s32 %v280, %v273
      %v291 = vadd.s32 %v280, %v274
      %v292 = vadd.s32 %v280, %v275
      %v293 = vadd.s32 %v280, %v276
      %v294 = vadd.s32 %v280, %v277
      %v295 = vadd.s32 %v280, %v278
      %v296 = vadd.s32 %v280, %v279
      %vm297 = vcmp.lt.s32.totalorder %v281, 128
      %vm298 = vcmp.lt.s32.totalorder %v282, 128
      %vm299 = vcmp.lt.s32.totalorder %v283, 128
      %vm300 = vcmp.lt.s32.totalorder %v284, 128
      %vm301 = vcmp.lt.s32.totalorder %v285, 128
      %vm302 = vcmp.lt.s32.totalorder %v286, 128
      %vm303 = vcmp.lt.s32.totalorder %v287, 128
      %vm304 = vcmp.lt.s32.totalorder %v288, 128
      %vm305 = vcmp.lt.s32.totalorder %v289, 128
      %vm306 = vcmp.lt.s32.totalorder %v290, 128
      %vm307 = vcmp.lt.s32.totalorder %v291, 128
      %vm308 = vcmp.lt.s32.totalorder %v292, 128
      %vm309 = vcmp.lt.s32.totalorder %v293, 128
      %vm310 = vcmp.lt.s32.totalorder %v294, 128
      %vm311 = vcmp.lt.s32.totalorder %v295, 128
      %vm312 = vcmp.lt.s32.totalorder %v296, 128
      %v313 = vsel %vm297, %v229, 0.0
      %v314 = vsel %vm298, %v230, 0.0
      %v315 = vsel %vm299, %v231, 0.0
      %v316 = vsel %vm300, %v232, 0.0
      %v317 = vsel %vm301, %v233, 0.0
      %v318 = vsel %vm302, %v234, 0.0
      %v319 = vsel %vm303, %v235, 0.0
      %v320 = vsel %vm304, %v236, 0.0
      %v321 = vsel %vm305, %v237, 0.0
      %v322 = vsel %vm306, %v238, 0.0
      %v323 = vsel %vm307, %v239, 0.0
      %v324 = vsel %vm308, %v240, 0.0
      %v325 = vsel %vm309, %v241, 0.0
      %v326 = vsel %vm310, %v242, 0.0
      %v327 = vsel %vm311, %v243, 0.0
      %v328 = vsel %vm312, %v244, 0.0
      %v329 = vsel %vm297, %v245, 0.0
      %v330 = vsel %vm298, %v246, 0.0
      %v331 = vsel %vm299, %v247, 0.0
      %v332 = vsel %vm300, %v248, 0.0
      %v333 = vsel %vm301, %v249, 0.0
      %v334 = vsel %vm302, %v250, 0.0
      %v335 = vsel %vm303, %v251, 0.0
      %v336 = vsel %vm304, %v252, 0.0
      %v337 = vsel %vm305, %v253, 0.0
      %v338 = vsel %vm306, %v254, 0.0
      %v339 = vsel %vm307, %v255, 0.0
      %v340 = vsel %vm308, %v256, 0.0
      %v341 = vsel %vm309, %v257, 0.0
      %v342 = vsel %vm310, %v258, 0.0
      %v343 = vsel %vm311, %v259, 0.0
      %v344 = vsel %vm312, %v260, 0.0
      %v345 = vmul.f32 %v313, %v329
      %v346 = vmul.f32 %v314, %v330
      %v347 = vmul.f32 %v315, %v331
      %v348 = vmul.f32 %v316, %v332
      %v349 = vmul.f32 %v317, %v333
      %v350 = vmul.f32 %v318, %v334
      %v351 = vmul.f32 %v319, %v335
      %v352 = vmul.f32 %v320, %v336
      %v353 = vmul.f32 %v321, %v337
      %v354 = vmul.f32 %v322, %v338
      %v355 = vmul.f32 %v323, %v339
      %v356 = vmul.f32 %v324, %v340
      %v357 = vmul.f32 %v325, %v341
      %v358 = vmul.f32 %v326, %v342
      %v359 = vmul.f32 %v327, %v343
      %v360 = vmul.f32 %v328, %v344
      %v361 = vld [vmem:[%s221] sm:$0xff]
      %v362 = vadd.f32 %v345, %v346
      %v363 = vadd.f32 %v362, %v347
      %v364 = vadd.f32 %v363, %v348
      %v365 = vadd.f32 %v364, %v349
      %v366 = vadd.f32 %v365, %v350
      %v367 = vadd.f32 %v366, %v351
      %v368 = vadd.f32 %v367, %v352
      %v369 = vadd.f32 %v368, %v353
      %v370 = vadd.f32 %v369, %v354
      %v371 = vadd.f32 %v370, %v355
      %v372 = vadd.f32 %v371, %v356
      %v373 = vadd.f32 %v372, %v357
      %v374 = vadd.f32 %v373, %v358
      %v375 = vadd.f32 %v374, %v359
      %v376 = vadd.f32 %v375, %v360
      %v377 = vadd.f32 %v361, %v376
      %378 = vst [vmem:[%s221] sm:$0xff] %v377
      %v379 = vmul.f32 %v313, %v313
      %v380 = vmul.f32 %v314, %v314
      %v381 = vmul.f32 %v315, %v315
      %v382 = vmul.f32 %v316, %v316
      %v383 = vmul.f32 %v317, %v317
      %v384 = vmul.f32 %v318, %v318
      %v385 = vmul.f32 %v319, %v319
      %v386 = vmul.f32 %v320, %v320
      %v387 = vmul.f32 %v321, %v321
      %v388 = vmul.f32 %v322, %v322
      %v389 = vmul.f32 %v323, %v323
      %v390 = vmul.f32 %v324, %v324
      %v391 = vmul.f32 %v325, %v325
      %v392 = vmul.f32 %v326, %v326
      %v393 = vmul.f32 %v327, %v327
      %v394 = vmul.f32 %v328, %v328
      %v395 = vld [vmem:[%s221 + $0x8] sm:$0xff]
      %v396 = vadd.f32 %v379, %v380
      %v397 = vadd.f32 %v396, %v381
      %v398 = vadd.f32 %v397, %v382
      %v399 = vadd.f32 %v398, %v383
      %v400 = vadd.f32 %v399, %v384
      %v401 = vadd.f32 %v400, %v385
      %v402 = vadd.f32 %v401, %v386
      %v403 = vadd.f32 %v402, %v387
      %v404 = vadd.f32 %v403, %v388
      %v405 = vadd.f32 %v404, %v389
      %v406 = vadd.f32 %v405, %v390
      %v407 = vadd.f32 %v406, %v391
      %v408 = vadd.f32 %v407, %v392
      %v409 = vadd.f32 %v408, %v393
      %v410 = vadd.f32 %v409, %v394
      %v411 = vadd.f32 %v395, %v410
      %412 = vst [vmem:[%s221 + $0x8] sm:$0xff] %v411
      %v413 = vmul.f32 %v329, %v329
      %v414 = vmul.f32 %v330, %v330
      %v415 = vmul.f32 %v331, %v331
      %v416 = vmul.f32 %v332, %v332
      %v417 = vmul.f32 %v333, %v333
      %v418 = vmul.f32 %v334, %v334
      %v419 = vmul.f32 %v335, %v335
      %v420 = vmul.f32 %v336, %v336
      %v421 = vmul.f32 %v337, %v337
      %v422 = vmul.f32 %v338, %v338
      %v423 = vmul.f32 %v339, %v339
      %v424 = vmul.f32 %v340, %v340
      %v425 = vmul.f32 %v341, %v341
      %v426 = vmul.f32 %v342, %v342
      %v427 = vmul.f32 %v343, %v343
      %v428 = vmul.f32 %v344, %v344
      %v429 = vld [vmem:[%s221 + $0x10] sm:$0xff]
      %v430 = vadd.f32 %v413, %v414
      %v431 = vadd.f32 %v430, %v415
      %v432 = vadd.f32 %v431, %v416
      %v433 = vadd.f32 %v432, %v417
      %v434 = vadd.f32 %v433, %v418
      %v435 = vadd.f32 %v434, %v419
      %v436 = vadd.f32 %v435, %v420
      %v437 = vadd.f32 %v436, %v421
      %v438 = vadd.f32 %v437, %v422
      %v439 = vadd.f32 %v438, %v423
      %v440 = vadd.f32 %v439, %v424
      %v441 = vadd.f32 %v440, %v425
      %v442 = vadd.f32 %v441, %v426
      %v443 = vadd.f32 %v442, %v427
      %v444 = vadd.f32 %v443, %v428
      %v445 = vadd.f32 %v429, %v444
      %446 = vst [vmem:[%s221 + $0x10] sm:$0xff] %v445
      %p447 = scmp.lt.s32.totalorder %s17, 1
      %s448 = scalar_select %p447, %s17, 1
      %s449 = smul.addr %s448, 3
      %s450 = smul.addr %s449, 8
      %s451 = scalar_lea.vmem %s2, %s450
      // Predicated region
      $region33: #{dice_loss_lv_2d_3d.3} parent=27 // pred_check
        %p452 = pneg %p107
      $region34: #{dice_loss_lv_2d_3d.3} parent=27 // pred_check_branch
        %454 = sbr.rel (%p452) target = $region36
      $region35: #{dice_loss_lv_2d_3d.3} parent=27 // pred_region
        _
      $region36: #{dice_loss_lv_2d_3d.3} parent=27 // pred_fallthru
        _
    $region28: #{dice_loss_lv_2d_3d.3} parent=5 // pred_fallthru
      _
    %p455 = scmp.le.s32.totalorder 2, %s8
    // Predicated region
    $region37: #{dice_loss_lv_2d_3d.3} parent=5 // pred_check
      %p456 = pneg %p455
    $region38: #{dice_loss_lv_2d_3d.3} parent=5 // pred_check_branch
      %458 = sbr.rel (%p456) target = $region40
    $region39: #{dice_loss_lv_2d_3d.3} parent=5 // pred_region
      %s459 = ssub.s32 %s8, 2
      // Predicated region
      $region41: #{dice_loss_lv_2d_3d.3} parent=39 // pred_check
        %p460 = pneg %p113
      $region42: #{dice_loss_lv_2d_3d.3} parent=39 // pred_check_branch
        %462 = sbr.rel (%p460) target = $region44
      $region43: #{dice_loss_lv_2d_3d.3} parent=39 // pred_region
        %p463 = scmp.lt.s32.totalorder %s19, 1
        %s464 = scalar_select %p463, %s19, 1
        %s465 = smul.addr %s464, 3
        %s466 = smul.addr %s465, 8
        %s467 = scalar_lea.vmem %s2, %s466
      $region44: #{dice_loss_lv_2d_3d.3} parent=39 // pred_fallthru
        _
    $region40: #{dice_loss_lv_2d_3d.3} parent=5 // pred_fallthru
      _
  $region6: #{dice_loss_lv_2d_3d.3} parent=0 // loop_footer
    %s12 = sadd.s32 1, %s8
  $region7: #{dice_loss_lv_2d_3d.3} parent=0 // loop_footer_branch
    %7 = sbr.rel target = $region3
  $region8: #{dice_loss_lv_2d_3d.3} parent=0 // loop_exit
    _

</llo_original>
